<compile_context>
chip_gen: v5e
topology: v5e:2x2
jax: 0.10.0
libtpu: 0.0.40
codegen_flags: <defaults>
</compile_context>

<pallas_src>
import jax
import jax.numpy as jnp
from jax import lax
from jax.experimental import pallas as pl
from jax.experimental.pallas import tpu as pltpu

EPS = 1e-5


def _make_resident_spec(block_shape, index_map):
    """BlockSpec for operands whose block is constant across the inner grid axis.

    Single-buffering (pl.Buffered(1)) halves their VMEM cost vs. the default
    double-buffering. Falls back to a plain BlockSpec if this JAX build does
    not accept pipeline_mode on BlockSpec (then they are merely double-buffered,
    which is still correct).
    """
    try:
        return pl.BlockSpec(block_shape, index_map, pipeline_mode=pl.Buffered(1))
    except Exception:
        return pl.BlockSpec(block_shape, index_map)


def prenorm_linear_kernel(x_ref, w_ref, b_ref, o_ref):
    # x_ref: (TM, D_in) row tile         w_ref: (D_in, TN) weight panel (g folded in)
    # b_ref: (1, TN) f32 bias panel      o_ref: (TM, TN) output tile
    x = x_ref[...]

    # MXU matmul first (bf16 operands by default, f32 accumulation). ScaleNorm
    # is applied AFTER the matmul: diag(s)·X·W == (X·W)·diag(s), so this is
    # exact, keeps full-precision x feeding the row norm, and lets the norm's
    # XLU reduce + EUP rsqrt run on otherwise-idle slots alongside the MXU.
    y = jnp.dot(x.astype(w_ref.dtype), w_ref[...],
                preferred_element_type=jnp.float32)

    xf = x.astype(jnp.float32)
    ss = jnp.sum(xf * xf, axis=-1, keepdims=True)            # (TM, 1)
    scale = lax.rsqrt(jnp.maximum(ss, EPS * EPS))             # == 1 / max(||x||, eps)

    o_ref[...] = (y * scale + b_ref[...]).astype(o_ref.dtype)


def prepare_prenorm_linear_params(g, w_pt, b, matmul_dtype=jnp.bfloat16):
    """One-time parameter prep, hoisted out of the per-call path.

    Folds the ScaleNorm gain g into the weight, transposes the torch-style
    (out, in) weight to (in, out), and casts it to the MXU dtype (bf16 default:
    the MXU is bf16-native on v5e/v6e/v7x and bf16 halves the resident weight's
    VMEM/HBM footprint).
    """
    w = jnp.asarray(g, jnp.float32) * jnp.transpose(jnp.asarray(w_pt, jnp.float32))
    w = w.astype(matmul_dtype)
    b2d = jnp.asarray(b, jnp.float32).reshape(1, -1)
    return w, b2d


def _vmem_budget_and_limit():
    """Per-generation (budget for tile sizing, vmem_limit_bytes cap)."""
    try:
        cap = int(pltpu.get_tpu_info().vmem_capacity_bytes)
    except Exception:
        cap = 64 * 1024 * 1024                        # be conservative (v7x-class)
    if cap >= 128 * 1024 * 1024:                      # v5e / v6e: 128 MiB physical
        return 80 * 1024 * 1024, 100 * 1024 * 1024
    return 32 * 1024 * 1024, 48 * 1024 * 1024         # v7x-class: 64 MiB physical


def prenorm_linear(x, w_in_out, b2d, *, tm=None, tn=None):
    """PreNorm(dim, Linear)(x): ScaleNorm over the last dim fused with x @ W + b.

    x:        (..., D_in) activations (f32 or bf16; output keeps x.dtype).
    w_in_out: (D_in, D_out) weight with the ScaleNorm gain already folded in
              (see prepare_prenorm_linear_params).
    b2d:      (1, D_out) f32 bias.
    """
    orig_shape = x.shape
    D_in = orig_shape[-1]
    D_out = w_in_out.shape[1]
    M = 1
    for s in orig_shape[:-1]:
        M *= int(s)
    x2d = x.reshape(M, D_in)

    x_item = jnp.dtype(x.dtype).itemsize
    out_dtype = x.dtype
    out_item = jnp.dtype(out_dtype).itemsize
    w_item = jnp.dtype(w_in_out.dtype).itemsize

    budget, limit_cap = _vmem_budget_and_limit()

    # ---- output-column panel: keep the full weight VMEM-resident when it fits,
    # otherwise stream it in lane-dense (D_in, tn) panels over a second grid axis.
    if tn is None:
        if D_in * D_out * w_item <= budget // 2:
            tn = D_out
        else:
            tn = (budget // 2) // max(D_in * w_item, 1)
            tn = max(128, (tn // 128) * 128)
            tn = min(tn, D_out)
    else:
        tn = min(int(tn), D_out)
    if tn != D_out:
        tn = max(128, (tn // 128) * 128)      # lane-dense panels per (8,128) rule

    # ---- row tile: biggest tile inside the budget, capped at 512 rows
    # (512 already ~85% of HBM roofline; 1024 buys ~1% for 2x the VMEM).
    min_tile_m = 16 if min(x_item, out_item) < 4 else 8
    if tm is None:
        fixed = D_in * tn * w_item + tn * 4            # single-buffered W panel + bias
        per_row = (2 * D_in * x_item                   # double-buffered x tile
                   + 2 * tn * out_item                 # double-buffered out tile
                   + 4 * D_in + w_item * D_in          # in-kernel f32 / matmul-dtype x temps
                   + 8 * tn                            # f32 accumulator + scaled result
                   + 16)                               # ss / scale
        tm = (budget - fixed) // per_row
        tm = min(tm, 512)
    tm = max(min_tile_m, (int(tm) // min_tile_m) * min_tile_m)
    if M <= tm:
        tm = M            # single row block; block dim == full array dim is always legal

    m_tiles = pl.cdiv(M, tm)       # ragged last tile handled by Pallas (no HBM pad copy)
    n_tiles = pl.cdiv(D_out, tn)
    grid = (n_tiles, m_tiles)      # column panel outer -> W panel resident across the row sweep

    vmem_needed = (2 * tm * D_in * x_item + 2 * tm * tn * out_item
                   + 2 * D_in * tn * w_item + 2 * tn * 4
                   + tm * D_in * 4 + tm * D_in * w_item + 2 * tm * tn * 4)
    vmem_limit = int(min(max(vmem_needed + (2 << 20), 16 * 1024 * 1024), limit_cap))

    cost = pl.CostEstimate(
        flops=2 * M * D_in * D_out,
        transcendentals=M * n_tiles,                   # one rsqrt per row per column panel
        bytes_accessed=(M * D_in * x_item * n_tiles + M * D_out * out_item
                        + D_in * D_out * w_item + D_out * 4),
    )

    out2d = pl.pallas_call(
        prenorm_linear_kernel,
        out_shape=jax.ShapeDtypeStruct((M, D_out), out_dtype),
        grid_spec=pltpu.PrefetchScalarGridSpec(
            num_scalar_prefetch=0,
            grid=grid,
            in_specs=[
                pl.BlockSpec((tm, D_in), lambda j, i: (i, 0)),         # x row tile (double-buffered stream)
                _make_resident_spec((D_in, tn), lambda j, i: (0, j)),  # weight panel (single-buffered resident)
                _make_resident_spec((1, tn), lambda j, i: (0, j)),     # bias panel (single-buffered resident)
            ],
            out_specs=pl.BlockSpec((tm, tn), lambda j, i: (i, j)),
        ),
        compiler_params=pltpu.CompilerParams(
            dimension_semantics=("arbitrary", "parallel"),   # row tiles shard across v7x's 2 TCs
            vmem_limit_bytes=vmem_limit,
        ),
        cost_estimate=cost,
    )(x2d, w_in_out, b2d)

    return out2d.reshape(orig_shape[:-1] + (D_out,))


def prenorm_linear_ref(x, g, w_pt, b):
    """Pure-JAX reference mirroring the PyTorch module (f32 throughout)."""
    n = jnp.linalg.norm(x, axis=-1, keepdims=True)
    n = jnp.maximum(n, EPS)
    xn = x / n * g
    return xn @ w_pt.T + b


if __name__ == "__main__":
    B, N, D = 2, 8, 32   # batch=2, seq=8, hidden dim=32

    key = jax.random.PRNGKey(0)
    kx, kw, kb = jax.random.split(key, 3)

    x = jax.random.normal(kx, (B, N, D), dtype=jnp.float32)

    # Deterministic parameter init (synthetic, not a checkpoint load)
    g = jnp.float32(1.0)                                        # ScaleNorm.g init
    w_pt = jax.random.normal(kw, (D, D), jnp.float32) * (1.0 / jnp.sqrt(D))
    b = jax.random.normal(kb, (D,), jnp.float32) * 0.01

    ref = prenorm_linear_ref(x, g, w_pt, b)

    # Production path: bf16 MXU default, params prepared once and reused.
    w_bf16, b2d = prepare_prenorm_linear_params(g, w_pt, b)     # bf16 default
    out = prenorm_linear(x, w_bf16, b2d)
    jax.block_until_ready(out)
    assert out.shape == (B, N, D)
    assert jnp.allclose(out, ref, atol=3e-2, rtol=3e-2), "bf16 path mismatch vs reference"

    # f32 MXU path: tight numerical check of the fused ScaleNorm + Linear math.
    w_f32, b2d_f32 = prepare_prenorm_linear_params(g, w_pt, b, matmul_dtype=jnp.float32)
    out_f32 = prenorm_linear(x, w_f32, b2d_f32)
    jax.block_until_ready(out_f32)
    assert jnp.allclose(out_f32, ref, atol=1e-4, rtol=1e-4), "f32 path mismatch vs reference"

    # Multi-row-tile + ragged M (M=10, tm=8 -> grid of 2 with a partial last tile,
    # handled in-kernel with no wrapper-side HBM pad copy).
    x_odd = jax.random.normal(kx, (2, 5, D), dtype=jnp.float32)
    ref_odd = prenorm_linear_ref(x_odd, g, w_pt, b)
    out_odd = prenorm_linear(x_odd, w_f32, b2d_f32, tm=8)
    jax.block_until_ready(out_odd)
    assert jnp.allclose(out_odd, ref_odd, atol=1e-4, rtol=1e-4), "ragged/tiled mismatch"

    # Output-column panel path (weight streamed in (D, tn) panels, 2-D grid).
    D2 = 256
    x2 = jax.random.normal(kx, (2, 8, D2), jnp.float32)
    w2 = jax.random.normal(kw, (D2, D2), jnp.float32) * (1.0 / jnp.sqrt(D2))
    b2 = jax.random.normal(kb, (D2,), jnp.float32) * 0.01
    w2p, b2p = prepare_prenorm_linear_params(g, w2, b2, matmul_dtype=jnp.float32)
    out2 = prenorm_linear(x2, w2p, b2p, tn=128)
    jax.block_until_ready(out2)
    ref2 = prenorm_linear_ref(x2, g, w2, b2)
    assert jnp.allclose(out2, ref2, atol=1e-4, rtol=1e-4), "column-panel mismatch"

    print("KERNEL_OK")
</pallas_src>

<mosaic_0001>
module attributes {stable_mosaic.version = 11 : i64} {
  func.func @prenorm_linear_kernel(%arg0: i32, %arg1: i32, %arg2: memref<16x32xf32, #tpu.memory_space<vmem>>, %arg3: memref<32x32xbf16, #tpu.memory_space<vmem>>, %arg4: memref<1x32xf32, #tpu.memory_space<vmem>>, %arg5: memref<16x32xf32, #tpu.memory_space<vmem>>) attributes {dimension_semantics = [#tpu.dimension_semantics<arbitrary>, #tpu.dimension_semantics<parallel>], iteration_bounds = array<i64: 1, 1>, scalar_prefetch = 0 : i64, scratch_operands = 0 : i64, tpu.core_type = #tpu.core_type<tc>, window_params = [{transform_indices = @transform_0, window_bounds = array<i64: 16, 32>}, {pipeline_mode = #tpu.pipeline_mode<synchronous>, transform_indices = @transform_1, window_bounds = array<i64: 32, 32>}, {pipeline_mode = #tpu.pipeline_mode<synchronous>, transform_indices = @transform_2, window_bounds = array<i64: 1, 32>}, {transform_indices = @transform_3, window_bounds = array<i64: 16, 32>}]} {
    %c0 = arith.constant 0 : index
    %c0_0 = arith.constant 0 : index
    %0 = vector.load %arg2[%c0, %c0_0] : memref<16x32xf32, #tpu.memory_space<vmem>>, vector<16x32xf32>
    %1 = arith.truncf %0 : vector<16x32xf32> to vector<16x32xbf16>
    %c0_1 = arith.constant 0 : index
    %c0_2 = arith.constant 0 : index
    %2 = vector.load %arg3[%c0_1, %c0_2] : memref<32x32xbf16, #tpu.memory_space<vmem>>, vector<32x32xbf16>
    %cst = arith.constant dense<0.000000e+00> : vector<16x32xf32>
    %3 = tpu.matmul %1, %2, %cst {dimension_numbers = #tpu.dot_dimension_numbers<[1], [0], [0], [1], [0, 0, 1, 1], [], []>} : vector<16x32xbf16>, vector<32x32xbf16>, vector<16x32xf32> -> vector<16x32xf32>
    %4 = arith.mulf %0, %0 : vector<16x32xf32>
    %cst_3 = arith.constant dense<0.000000e+00> : vector<16xf32>
    %5 = vector.multi_reduction <add>, %4, %cst_3 [1] : vector<16x32xf32> to vector<16xf32>
    %6 = vector.shape_cast %5 : vector<16xf32> to vector<16x1xf32>
    %cst_4 = arith.constant 1.000000e-10 : f32
    %7 = vector.broadcast %cst_4 : f32 to vector<16x1xf32>
    %8 = arith.maximumf %6, %7 : vector<16x1xf32>
    %9 = math.rsqrt %8 : vector<16x1xf32>
    %10 = vector.broadcast %9 : vector<16x1xf32> to vector<16x32xf32>
    %11 = arith.mulf %3, %10 : vector<16x32xf32>
    %c0_5 = arith.constant 0 : index
    %c0_6 = arith.constant 0 : index
    %12 = vector.load %arg4[%c0_5, %c0_6] : memref<1x32xf32, #tpu.memory_space<vmem>>, vector<1x32xf32>
    %13 = vector.broadcast %12 : vector<1x32xf32> to vector<16x32xf32>
    %14 = arith.addf %11, %13 : vector<16x32xf32>
    %c0_7 = arith.constant 0 : index
    %c0_8 = arith.constant 0 : index
    %15 = vector.load %arg5[%c0_7, %c0_8] : memref<16x32xf32, #tpu.memory_space<vmem>>, vector<16x32xf32>
    tpu.vector_store %arg5[%c0_7, %c0_8], %14 {strides = array<i32>} : memref<16x32xf32, #tpu.memory_space<vmem>>, vector<16x32xf32>,
    return
  }
  func.func @transform_0(%arg0: i32, %arg1: i32) -> (i32, i32) {
    %c0_i32 = arith.constant 0 : i32
    %c0_i32_0 = arith.constant 0 : i32
    return %arg1, %c0_i32 : i32, i32
  }
  func.func @transform_1(%arg0: i32, %arg1: i32) -> (i32, i32) {
    %c0_i32 = arith.constant 0 : i32
    %c0_i32_0 = arith.constant 0 : i32
    return %c0_i32, %arg0 : i32, i32
  }
  func.func @transform_2(%arg0: i32, %arg1: i32) -> (i32, i32) {
    %c0_i32 = arith.constant 0 : i32
    %c0_i32_0 = arith.constant 0 : i32
    return %c0_i32, %arg0 : i32, i32
  }
  func.func @transform_3(%arg0: i32, %arg1: i32) -> (i32, i32) {
    %c0_i32 = arith.constant 0 : i32
    return %arg1, %arg0 : i32, i32
  }
}

</mosaic_0001>

<llo_original>
// kernel: tpu_custom_call.1
$region0: #{tpu_custom_call.1}
  #allocation0 [shape = 'u32[]', space=smem, size = 0x4, offset = 0x4, fixed_abs, tag = 'smem constant byte address 0x4 - core index']
  #allocation1 [shape = 'u32[72,128]{1,0:T(1,128)}', space=vmem, size = 0x9000, scoped, tag = 'internal scratch']
  %s0 = inlined_call_operand.hbm [shape: f32[16,32], index: 0, kind: input, shape index: {}]
  %s1 = inlined_call_operand.hbm [shape: bf16[32,32], index: 1, kind: input, shape index: {}]
  %s2 = inlined_call_operand.vmem [shape: f32[1,32], index: 2, kind: input, shape index: {}]
  %s3 = inlined_call_operand.hbm [shape: f32[16,32], index: 3, kind: output, shape index: {}]
  %s4 = sld [smem:[#allocation0]]
  $region30: #{tpu_custom_call.1} parent=0
    _
  %s6 = ssub.s32 1, %s4
  %s7 = scalar_select 0, %s6, %s4
  $region1: #{tpu_custom_call.1} parent=0
    #allocation2 [shape = 'u8[8192]{0}', space=vmem, size = 0x2000, scoped, tag = 'input window, operand 0, single buffered']
    #allocation3 [shape = 's32[1]{0}', space=sflag, size = 0x4, scoped, tag = 'scoped memory for tpu_custom_call.1']
    #allocation4 [shape = 's32[1]{0}', space=sflag, size = 0x4, scoped, tag = 'scoped memory for tpu_custom_call.1']
    #allocation5 [shape = 'u8[8192]{0}', space=vmem, size = 0x2000, scoped, tag = 'input window, operand 1, single buffered']
    #allocation6 [shape = 's32[1]{0}', space=sflag, size = 0x4, scoped, tag = 'scoped memory for tpu_custom_call.1']
    #allocation7 [shape = 'u8[8192]{0}', space=vmem, size = 0x2000, scoped, tag = 'output window, operand 0, single buffered']
    %8 = vsyncpa [#allocation3], 0
    %9 = vsyncpa [#allocation6], 0
    %10 = vsyncpa [#allocation4], 0
    // Predicated region
    $region2: #{tpu_custom_call.1} parent=1 // pred_check
      _
    $region3: #{tpu_custom_call.1} parent=1 // pred_check_branch
      %12 = sbr.rel (0) target = $region5
    $region4: #{tpu_custom_call.1} parent=1 // pred_region
      %14 = vsyncadd [#allocation3], 0
      %s15 = sshll.u32 %s0, 4
      %s16 = int_to_ptr.hbm [resolvable:$true] %s15
      %s17 = sshll.u32 [#allocation2], 4
      %s18 = int_to_ptr.vmem [resolvable:$true] %s17
      %23 = dma.hbm_to_vmem [thread:$0]  %s16, 256, %s18, [#allocation3], 128, 128, 8
    $region5: #{tpu_custom_call.1} parent=1 // pred_fallthru
      _
    // Predicated region
    $region6: #{tpu_custom_call.1} parent=1 // pred_check
      _
    $region7: #{tpu_custom_call.1} parent=1 // pred_check_branch
      %25 = sbr.rel (0) target = $region9
    $region8: #{tpu_custom_call.1} parent=1 // pred_region
      %27 = vsyncadd [#allocation6], 0
      %s28 = sshll.u32 %s1, 4
      %s29 = int_to_ptr.hbm [resolvable:$true] %s28
      %s30 = sshll.u32 [#allocation5], 4
      %s31 = int_to_ptr.vmem [resolvable:$true] %s30
      %36 = dma.hbm_to_vmem [thread:$0]  %s29, 256, %s31, [#allocation6], 64, 64, 4
    $region9: #{tpu_custom_call.1} parent=1 // pred_fallthru
      _
    // Predicated region
    $region10: #{tpu_custom_call.1} parent=1 // pred_check
      _
    $region11: #{tpu_custom_call.1} parent=1 // pred_check_branch
      %38 = sbr.rel (0) target = $region13
    $region12: #{tpu_custom_call.1} parent=1 // pred_region
      _
    $region13: #{tpu_custom_call.1} parent=1 // pred_fallthru
      _
    // Predicated region
    $region14: #{tpu_custom_call.1} parent=1 // pred_check
      _
    $region15: #{tpu_custom_call.1} parent=1 // pred_check_branch
      %40 = sbr.rel (0) target = $region17
    $region16: #{tpu_custom_call.1} parent=1 // pred_region
      %42 = dma.done [#allocation3], 256
    $region17: #{tpu_custom_call.1} parent=1 // pred_fallthru
      _
    // Predicated region
    $region18: #{tpu_custom_call.1} parent=1 // pred_check
      _
    $region19: #{tpu_custom_call.1} parent=1 // pred_check_branch
      %44 = sbr.rel (0) target = $region21
    $region20: #{tpu_custom_call.1} parent=1 // pred_region
      %46 = dma.done [#allocation6], 256
    $region21: #{tpu_custom_call.1} parent=1 // pred_fallthru
      _
    %v48 = vld [vmem:[#allocation2] sm:$0xff]
    %v49 = vld [vmem:[#allocation2 + $0x8] sm:$0xff]
    %v50 = vpack.c.bf16 %v49, %v48
    %v51 = vld [vmem:[#allocation5] sm:$0xf]
    %v52 = vld [vmem:[#allocation5 + $0x4] sm:$0xf]
    %v53 = vld [vmem:[#allocation5 + $0x8] sm:$0xf]
    %v54 = vld [vmem:[#allocation5 + $0xc] sm:$0xf]
    %v59 = vunpack.c.l.b16 %v51
    %v60 = vunpack.c.l.b16 %v52
    %v61 = vunpack.c.l.b16 %v53
    %v62 = vunpack.c.l.b16 %v54
    %v63 = vpack.c.b16 %v60, %v59
    %v64 = vpack.c.b16 %v62, %v61
    %vm67 = vcmask 261120
    %v69 = vsel %vm67, %v50, 0
    %71 = vmatpush.bf16.msra.mxu0 0
    %72 = vmatpush.bf16.msra.mxu0 0
    %73 = vmatpush.bf16.msra.mxu0 0
    %74 = vmatpush.bf16.msra.mxu0 0
    %75 = vmatpush.bf16.msra.mxu0 0
    %76 = vmatpush.bf16.msra.mxu0 0
    %77 = vmatpush.bf16.msra.mxu0 %v64
    %78 = vmatpush.bf16.msra.mxu0 %v63
    %79 = vmatmul.bf16.gmra.mxu0 %v69
    %v80 = vpop.f32.mrf.mxu0
    %v81 = vadd.f32 0.0, %v80
    %v82 = vpop.f32.mrf.mxu0
    %v83 = vadd.f32 0.0, %v82
    %84 = vdwg.mxu0
    %v85 = vmul.f32 %v48, %v48
    %v86 = vmul.f32 %v49, %v49
    %v87 = vsel %vm67, %v85, 0.0
    %88 = vadd.xlane.f32.xlu0 %v87
    %v89 = vpop.xlane.xlu0 %88
    %v90 = vsel %vm67, %v86, 0.0
    %91 = vadd.xlane.f32.xlu0 %v90
    %v92 = vpop.xlane.xlu0 %91
    %v93 = vmax.f32 %v89, 1e-10
    %v94 = vmax.f32 %v92, 1e-10
    %v95 = vrsqrt.pop %v93
    %v96 = vmul.f32 %v95, %v93
    %v97 = vmul.f32 %v96, %v95
    %v98 = vmul.f32 0.5, %v97
    %v99 = vsub.f32 1.5, %v98
    %v100 = vmul.f32 %v95, %v99
    %vm101 = vweird.f32 %v93
    %vm102 = vweird.f32 %v95
    %vm103 = vmor %vm101, %vm102
    %v104 = vsel %vm103, %v95, %v100
    %v105 = vrsqrt.pop %v94
    %v106 = vmul.f32 %v105, %v94
    %v107 = vmul.f32 %v106, %v105
    %v108 = vmul.f32 0.5, %v107
    %v109 = vsub.f32 1.5, %v108
    %v110 = vmul.f32 %v105, %v109
    %vm111 = vweird.f32 %v94
    %vm112 = vweird.f32 %v105
    %vm113 = vmor %vm111, %vm112
    %v114 = vsel %vm113, %v105, %v110
    %v115 = vmul.f32 %v81, %v104
    %v116 = vmul.f32 %v83, %v114
    %v117 = vld [vmem:[%s2] sm:$0x1]
    %v119 = vperm.slane %v117, 0
    %v121 = vadd.f32 %v115, %v119
    %v122 = vadd.f32 %v116, %v119
    %123 = vst.msk [vmem:[#allocation7] sm:$0xff] %vm67, %v121
    %124 = vst.msk [vmem:[#allocation7 + $0x8] sm:$0xff] %vm67, %v122
    // Predicated region
    $region22: #{tpu_custom_call.1} parent=1 // pred_check
      _
    $region23: #{tpu_custom_call.1} parent=1 // pred_check_branch
      %126 = sbr.rel (0) target = $region25
    $region24: #{tpu_custom_call.1} parent=1 // pred_region
      %128 = vsyncadd [#allocation4], 0
      %s129 = sshll.u32 [#allocation7], 4
      %s130 = int_to_ptr.vmem [resolvable:$true] %s129
      %s131 = sshll.u32 %s3, 4
      %s132 = int_to_ptr.hbm [resolvable:$true] %s131
      %137 = dma.vmem_to_hbm [thread:$0]  %s130, 256, %s132, [#allocation4], 128, 128, 8
    $region25: #{tpu_custom_call.1} parent=1 // pred_fallthru
      _
    // Predicated region
    $region26: #{tpu_custom_call.1} parent=1 // pred_check
      _
    $region27: #{tpu_custom_call.1} parent=1 // pred_check_branch
      %139 = sbr.rel (0) target = $region29
    $region28: #{tpu_custom_call.1} parent=1 // pred_region
      %141 = dma.done [#allocation4], 256
    $region29: #{tpu_custom_call.1} parent=1 // pred_fallthru
      _
    %142 = vsyncpa [#allocation3], 1
    %143 = vsyncpa [#allocation6], 1
    %144 = vsyncpa [#allocation4], 1

</llo_original>
